<compile_context>
chip_gen: v7x
topology: tpu7x:2x2x1
jax: 0.10.0
libtpu: 0.0.40
codegen_flags: <defaults>
</compile_context>

<pallas_src>
import functools
import math

import jax
import jax.numpy as jnp
from jax.experimental import pallas as pl
from jax.experimental.pallas import tpu as pltpu


def _focal_loss_kernel(x_ref, t_ref, out_ref, acc_ref, *,
                       gamma, eps, hw_valid, n_valid, size_average, tile_hw):
    b = pl.program_id(0)
    i = pl.program_id(1)

    @pl.when(jnp.logical_and(b == 0, i == 0))
    def _():
        acc_ref[...] = jnp.zeros_like(acc_ref)

    x = x_ref[...].astype(jnp.float32)   # (C, TILE_HW): classes on sublanes, pixels on lanes
    t = t_ref[...]                       # (1, TILE_HW) int32 labels

    # Gather the target-class logit: one-hot via sublane iota compare + C-way sum
    # (equivalent to the scatter_-built one_hot in the PyTorch reference).
    cls_idx = jax.lax.broadcasted_iota(jnp.int32, x.shape, 0)
    x_t = jnp.sum(jnp.where(cls_idx == t, x, 0.0), axis=0, keepdims=True)  # (1, TILE_HW)

    # log p_target via log-sum-exp (exp/log go to the EUP; no full softmax divide).
    row_max = jnp.max(x, axis=0, keepdims=True)
    lse = row_max + jnp.log(jnp.sum(jnp.exp(x - row_max), axis=0, keepdims=True))
    log_p = x_t - lse
    # clamp in the log domain == clip(p, eps, 1-eps) of the reference
    log_p = jnp.clip(log_p, math.log(eps), math.log1p(-eps))

    if gamma == 0:
        batch_loss = -log_p
    else:
        p = jnp.exp(log_p)
        batch_loss = -jnp.power(1.0 - p, gamma) * log_p

    # In-kernel validity mask for lane padding of the last HW tile (no HBM mask input).
    lane = jax.lax.broadcasted_iota(jnp.int32, (1, tile_hw), 1)
    mask = (i * tile_hw + lane < hw_valid).astype(jnp.float32)

    # Lane-dense partial sums; the scalar reduce happens once, at the end.
    acc_ref[...] += batch_loss * mask

    @pl.when(jnp.logical_and(b == pl.num_programs(0) - 1,
                             i == pl.num_programs(1) - 1))
    def _():
        total = jnp.sum(acc_ref[...], keepdims=True)   # (1, 1)
        if size_average:
            total = total / jnp.float32(n_valid)
        out_ref[...] = total


def focal_loss_pallas(logits_nchw, target_bhw, *, gamma=0.0, eps=1e-7,
                      size_average=True, max_tile_hw=8192):
    """FocalLoss.forward with default config. Returns (loss, 0)."""
    B, C, H, W = logits_nchw.shape
    HW = H * W

    # Native NCHW viewed as (B, C, HW): pure reshape, no transpose/copy.
    x = logits_nchw.reshape(B, C, HW)
    t = target_bhw.astype(jnp.int32).reshape(B, 1, HW)

    # TODO(synk): `ignore` (dynamic row filtering) and per-class `weight` are
    # not implemented; the default __init__ config has both disabled.
    # TODO(synk): v7x could additionally split the pixel range across both
    # TensorCores with per-core partial outputs; kept single-core for clarity.

    # Lane tile: multiple of 128, as large as possible to amortize per-step
    # overhead, capped (7*8192*4B doubled-buffered stays tiny vs scoped VMEM).
    hw_128 = ((HW + 127) // 128) * 128
    tile_hw = min(max_tile_hw, hw_128)
    hw_pad = ((HW + tile_hw - 1) // tile_hw) * tile_hw
    if hw_pad != HW:
        x = jnp.pad(x, ((0, 0), (0, 0), (0, hw_pad - HW)))
        t = jnp.pad(t, ((0, 0), (0, 0), (0, hw_pad - HW)))

    kernel = functools.partial(
        _focal_loss_kernel,
        gamma=float(gamma), eps=float(eps),
        hw_valid=HW, n_valid=B * HW,
        size_average=size_average, tile_hw=tile_hw,
    )

    out = pl.pallas_call(
        kernel,
        out_shape=jax.ShapeDtypeStruct((1, 1), jnp.float32),
        grid_spec=pltpu.PrefetchScalarGridSpec(
            num_scalar_prefetch=0,
            grid=(B, hw_pad // tile_hw),
            in_specs=[
                # squeezed batch dim; kernel sees (C, tile_hw) / (1, tile_hw)
                pl.BlockSpec((None, C, tile_hw), lambda b, i: (b, 0, i)),
                pl.BlockSpec((None, 1, tile_hw), lambda b, i: (b, 0, i)),
            ],
            out_specs=pl.BlockSpec((1, 1), lambda b, i: (0, 0)),
            scratch_shapes=[pltpu.VMEM((1, tile_hw), jnp.float32)],
        ),
        compiler_params=pltpu.CompilerParams(
            dimension_semantics=("arbitrary", "arbitrary")),
    )(x, t)

    return out[0, 0], 0


def _reference(logits_nchw, target_bhw, gamma=0.0, eps=1e-7):
    B, C, H, W = logits_nchw.shape
    x = jnp.transpose(logits_nchw, (0, 2, 3, 1)).reshape(-1, C)
    t = target_bhw.reshape(-1)
    probs = jax.nn.softmax(x, axis=1)
    onehot = jax.nn.one_hot(t, C, dtype=jnp.float32)
    p = jnp.clip(jnp.sum(probs * onehot, axis=1), eps, 1.0 - eps)
    log_p = jnp.log(p)
    batch_loss = -jnp.power(1.0 - p, gamma) * log_p if gamma != 0 else -log_p
    return jnp.mean(batch_loss)


if __name__ == "__main__":
    key = jax.random.PRNGKey(0)
    k1, k2 = jax.random.split(key)
    B, C, H, W = 2, 7, 16, 16            # nclass=7 (module default)
    logits = jax.random.normal(k1, (B, C, H, W), dtype=jnp.float32)
    target = jax.random.randint(k2, (B, H, W), 0, C, dtype=jnp.int32)

    loss, zero = focal_loss_pallas(logits, target, gamma=0.0)
    loss = jax.block_until_ready(loss)

    ref = _reference(logits, target, gamma=0.0)
    assert zero == 0
    assert jnp.allclose(loss, ref, rtol=1e-5, atol=1e-5), (loss, ref)
    print("KERNEL_OK")
</pallas_src>

<mosaic_0001>
module attributes {stable_mosaic.version = 11 : i64} {
  func.func @_focal_loss_kernel(%arg0: i32, %arg1: i32, %arg2: memref<1x7x256xf32, #tpu.memory_space<vmem>>, %arg3: memref<1x1x256xi32, #tpu.memory_space<vmem>>, %arg4: memref<1x1xf32, #tpu.memory_space<vmem>>, %arg5: memref<1x256xf32, #tpu.memory_space<vmem>>) attributes {dimension_semantics = [#tpu.dimension_semantics<arbitrary>, #tpu.dimension_semantics<arbitrary>], iteration_bounds = array<i64: 2, 1>, scalar_prefetch = 0 : i64, scratch_operands = 1 : i64, tpu.core_type = #tpu.core_type<tc>, window_params = [{transform_indices = @transform_0, window_bounds = array<i64: 1, 7, 256>}, {transform_indices = @transform_1, window_bounds = array<i64: 1, 1, 256>}, {pipeline_mode = #tpu.pipeline_mode<synchronous>, transform_indices = @transform_2, window_bounds = array<i64: 1, 1>}]} {
    %c0_i32 = arith.constant 0 : i32
    %0 = arith.cmpi eq, %arg0, %c0_i32 : i32
    %c0_i32_0 = arith.constant 0 : i32
    %1 = arith.cmpi eq, %arg1, %c0_i32_0 : i32
    %2 = arith.andi %0, %1 : i1
    %3 = arith.extui %2 : i1 to i32
    %c0_i32_1 = arith.constant 0 : i32
    %4 = arith.cmpi ne, %3, %c0_i32_1 : i32
    scf.if %4 {
      %cst_20 = arith.constant 0.000000e+00 : f32
      %49 = vector.broadcast %cst_20 : f32 to vector<1x256xf32>
      %c0_21 = arith.constant 0 : index
      %c0_22 = arith.constant 0 : index
      %50 = vector.load %arg5[%c0_21, %c0_22] : memref<1x256xf32, #tpu.memory_space<vmem>>, vector<1x256xf32>
      tpu.vector_store %arg5[%c0_21, %c0_22], %49 {strides = array<i32>} : memref<1x256xf32, #tpu.memory_space<vmem>>, vector<1x256xf32>,
    } else {
    }
    %c0 = arith.constant 0 : index
    %c0_2 = arith.constant 0 : index
    %c0_3 = arith.constant 0 : index
    %5 = vector.load %arg2[%c0, %c0_2, %c0_3] : memref<1x7x256xf32, #tpu.memory_space<vmem>>, vector<1x7x256xf32>
    %6 = vector.shape_cast %5 : vector<1x7x256xf32> to vector<7x256xf32>
    %c0_4 = arith.constant 0 : index
    %c0_5 = arith.constant 0 : index
    %c0_6 = arith.constant 0 : index
    %7 = vector.load %arg3[%c0_4, %c0_5, %c0_6] : memref<1x1x256xi32, #tpu.memory_space<vmem>>, vector<1x1x256xi32>
    %8 = vector.shape_cast %7 : vector<1x1x256xi32> to vector<1x256xi32>
    %9 = tpu.iota {dimensions = array<i32: 0>} : vector<7x256xi32>
    %10 = vector.broadcast %8 : vector<1x256xi32> to vector<7x256xi32>
    %11 = arith.cmpi eq, %9, %10 : vector<7x256xi32>
    %cst = arith.constant 0.000000e+00 : f32
    %12 = vector.broadcast %cst : f32 to vector<7x256xf32>
    %13 = arith.select %11, %6, %12 : vector<7x256xi1>, vector<7x256xf32>
    %cst_7 = arith.constant dense<0.000000e+00> : vector<256xf32>
    %14 = vector.multi_reduction <add>, %13, %cst_7 [0] : vector<7x256xf32> to vector<256xf32>
    %15 = vector.shape_cast %14 : vector<256xf32> to vector<1x256xf32>
    %cst_8 = arith.constant dense<0xFF800000> : vector<256xf32>
    %16 = vector.multi_reduction <maximumf>, %6, %cst_8 [0] : vector<7x256xf32> to vector<256xf32>
    %17 = vector.shape_cast %16 : vector<256xf32> to vector<1x256xf32>
    %18 = vector.broadcast %17 : vector<1x256xf32> to vector<7x256xf32>
    %19 = arith.subf %6, %18 : vector<7x256xf32>
    %20 = math.exp %19 : vector<7x256xf32>
    %cst_9 = arith.constant dense<0.000000e+00> : vector<256xf32>
    %21 = vector.multi_reduction <add>, %20, %cst_9 [0] : vector<7x256xf32> to vector<256xf32>
    %22 = vector.shape_cast %21 : vector<256xf32> to vector<1x256xf32>
    %23 = math.log %22 : vector<1x256xf32>
    %24 = arith.addf %17, %23 : vector<1x256xf32>
    %25 = arith.subf %15, %24 : vector<1x256xf32>
    %cst_10 = arith.constant -16.1180954 : f32
    %cst_11 = arith.constant -1.00000008E-7 : f32
    %26 = vector.broadcast %cst_10 : f32 to vector<1x256xf32>
    %27 = arith.maximumf %26, %25 : vector<1x256xf32>
    %28 = vector.broadcast %cst_11 : f32 to vector<1x256xf32>
    %29 = arith.minimumf %28, %27 : vector<1x256xf32>
    %cst_12 = arith.constant 0.000000e+00 : f32
    %30 = vector.broadcast %cst_12 : f32 to vector<1x256xf32>
    %31 = arith.subf %30, %29 : vector<1x256xf32>
    %32 = tpu.iota {dimensions = array<i32: 1>} : vector<1x256xi32>
    %c256_i32 = arith.constant 256 : i32
    %33 = arith.muli %arg1, %c256_i32 : i32
    %34 = vector.broadcast %33 : i32 to vector<1x256xi32>
    %35 = arith.addi %34, %32 : vector<1x256xi32>
    %c256_i32_13 = arith.constant 256 : i32
    %36 = vector.broadcast %c256_i32_13 : i32 to vector<1x256xi32>
    %37 = arith.cmpi slt, %35, %36 : vector<1x256xi32>
    %38 = arith.extui %37 : vector<1x256xi1> to vector<1x256xi32>
    %39 = arith.sitofp %38 : vector<1x256xi32> to vector<1x256xf32>
    %c0_14 = arith.constant 0 : index
    %c0_15 = arith.constant 0 : index
    %40 = vector.load %arg5[%c0_14, %c0_15] : memref<1x256xf32, #tpu.memory_space<vmem>>, vector<1x256xf32>
    %41 = arith.mulf %31, %39 : vector<1x256xf32>
    %42 = arith.addf %40, %41 : vector<1x256xf32>
    %c0_16 = arith.constant 0 : index
    %c0_17 = arith.constant 0 : index
    %43 = vector.load %arg5[%c0_16, %c0_17] : memref<1x256xf32, #tpu.memory_space<vmem>>, vector<1x256xf32>
    tpu.vector_store %arg5[%c0_16, %c0_17], %42 {strides = array<i32>} : memref<1x256xf32, #tpu.memory_space<vmem>>, vector<1x256xf32>,
    %c1_i32 = arith.constant 1 : i32
    %44 = arith.cmpi eq, %arg0, %c1_i32 : i32
    %c0_i32_18 = arith.constant 0 : i32
    %45 = arith.cmpi eq, %arg1, %c0_i32_18 : i32
    %46 = arith.andi %44, %45 : i1
    %47 = arith.extui %46 : i1 to i32
    %c0_i32_19 = arith.constant 0 : i32
    %48 = arith.cmpi ne, %47, %c0_i32_19 : i32
    scf.if %48 {
      %c0_20 = arith.constant 0 : index
      %c0_21 = arith.constant 0 : index
      %49 = vector.load %arg5[%c0_20, %c0_21] : memref<1x256xf32, #tpu.memory_space<vmem>>, vector<1x256xf32>
      %50 = vector.shape_cast %49 : vector<1x256xf32> to vector<1x1x256xf32>
      %cst_22 = arith.constant dense<0.000000e+00> : vector<1xf32>
      %51 = vector.multi_reduction <add>, %50, %cst_22 [1, 2] : vector<1x1x256xf32> to vector<1xf32>
      %52 = vector.shape_cast %51 : vector<1xf32> to vector<1x1x1xf32>
      %53 = vector.extract %52[0, 0, 0] : f32 from vector<1x1x1xf32>
      %54 = vector.broadcast %53 : f32 to vector<1x1xf32>
      %cst_23 = arith.constant 5.120000e+02 : f32
      %55 = vector.broadcast %cst_23 : f32 to vector<1x1xf32>
      %56 = arith.divf %54, %55 : vector<1x1xf32>
      %c0_24 = arith.constant 0 : index
      %c0_25 = arith.constant 0 : index
      %57 = vector.load %arg4[%c0_24, %c0_25] : memref<1x1xf32, #tpu.memory_space<vmem>>, vector<1x1xf32>
      tpu.vector_store %arg4[%c0_24, %c0_25], %56 {strides = array<i32>} : memref<1x1xf32, #tpu.memory_space<vmem>>, vector<1x1xf32>,
    } else {
    }
    return
  }
  func.func @transform_0(%arg0: i32, %arg1: i32) -> (i32, i32, i32) {
    %c0_i32 = arith.constant 0 : i32
    %c0_i32_0 = arith.constant 0 : i32
    return %arg0, %c0_i32, %arg1 : i32, i32, i32
  }
  func.func @transform_1(%arg0: i32, %arg1: i32) -> (i32, i32, i32) {
    %c0_i32 = arith.constant 0 : i32
    %c0_i32_0 = arith.constant 0 : i32
    return %arg0, %c0_i32, %arg1 : i32, i32, i32
  }
  func.func @transform_2(%arg0: i32, %arg1: i32) -> (i32, i32) {
    %c0_i32 = arith.constant 0 : i32
    %c0_i32_0 = arith.constant 0 : i32
    %c0_i32_1 = arith.constant 0 : i32
    return %c0_i32, %c0_i32_0 : i32, i32
  }
}

</mosaic_0001>

<llo_original>
// kernel: tpu_custom_call.1
$region0: #{tpu_custom_call.1}
  #allocation0 [shape = 'u32[]', space=smem, size = 0x4, offset = 0x4, fixed_abs, tag = 'smem constant byte address 0x4 - core index']
  #allocation1 [shape = 'u32[144,128]{1,0:T(1,128)}', space=vmem, size = 0x12000, scoped, tag = 'internal scratch']
  #allocation2 [shape = 'f32[1,256]{1,0:T(1,128)}', space=vmem, size = 0x400, scoped, tag = 'scratch operand']
  %s0 = inlined_call_operand.vmem [shape: f32[2,7,256], index: 0, kind: input, shape index: {}]
  %s1 = inlined_call_operand.vmem [shape: s32[2,1,256], index: 1, kind: input, shape index: {}]
  %s2 = inlined_call_operand.hbm [shape: f32[1,1], index: 2, kind: output, shape index: {}]
  %s3 = sld [smem:[#allocation0]]
  $region49: #{tpu_custom_call.1} parent=0
    _
  %s5 = ssub.s32 1, %s3
  %s6 = scalar_select 0, %s5, %s3
  $region1: #{tpu_custom_call.1} parent=0
    #allocation3 [shape = 'u8[512]{0}', space=vmem, size = 0x400, scoped, tag = 'output window, operand 0, single buffered']
    #allocation4 [shape = 's32[2]{0}', space=sflag, size = 0x8, scoped, tag = 'scoped memory for tpu_custom_call.1']
    %7 = vsyncpa [#allocation4], 0
    loop: start=0, step=1, limit=4
    $region2: #{tpu_custom_call.1} parent=1 // loop_pre_header
      _
    $region3: #{tpu_custom_call.1} parent=1 // loop_header
      %s9 = sphi 0, %s13
      %p10 = scmp.ge.s32.totalorder %s9, 4
      %s16 = sphi 0, %s28
      %s17 = sphi 0, %s24
      %s18 = sphi 0, %s16
      %s19 = sphi 0, %s17
      %s20 = sphi 0, %s18
      %s21 = sphi 0, %s19
      %s33 = sphi 0, %s35
      %s36 = sphi 0, %s33
      %s37 = sphi 0, %s36
      %s53 = sphi 0, %s37
      %s61 = sphi 0, %s63
      %s64 = sphi 0, %s61
      %s65 = sphi 0, %s64
      %s81 = sphi 0, %s65
      %s85 = sphi 0, %s85
      %s87 = sphi 0, %s85
      %s88 = sphi 0, %s87
      %s102 = sphi 0, %s88
    $region4: #{tpu_custom_call.1} parent=1 // loop_header_branch
      %12 = sbr.rel (%p10) target = $region8
    $region5: #{tpu_custom_call.1} parent=1 // loop_body
      %s14 = ssub.s32 %s9, 1
      %s15 = ssub.s32 %s9, 2
      %s22 = sadd.s32 1, %s17
      %p23 = scmp.ge.s32.totalorder %s22, 1
      %s24 = scalar_select %p23, 0, %s22
      %s25 = sadd.s32 1, %s16
      %s26 = scalar_select %p23, %s25, %s16
      %p27 = scmp.ge.s32.totalorder %s26, 2
      %s28 = scalar_select %p27, 0, %s26
      %s29 = ssub.s32 %s16, %s28
      %s30 = ssub.s32 %s17, %s24
      %s31 = sor.u32 %s29, %s30
      %p32 = scmp.eq.s32.totalorder %s31, 0
      %s34 = sadd.s32 %s33, 1
      %s35 = scalar_select %p32, %s33, %s34
      %p38 = pneg %p32
      %p39 = scmp.eq.s32.totalorder %s9, 1
      %p40 = por %p38, %p39
      %p41 = scmp.ne.s32.totalorder %s33, %s36
      %p42 = scmp.eq.s32.totalorder %s9, 0
      %p43 = por %p41, %p42
      %p44 = scmp.ne.s32.totalorder %s33, %s36
      %p45 = scmp.eq.s32.totalorder %s14, 1
      %p46 = por %p44, %p45
      %p47 = scmp.ne.s32.totalorder %s36, %s37
      %p48 = scmp.eq.s32.totalorder %s14, 0
      %p49 = por %p47, %p48
      %p50 = scmp.ne.s32.totalorder %s36, %s37
      %p51 = scmp.eq.s32.totalorder %s15, 1
      %p52 = por %p50, %p51
      %p54 = scmp.ne.s32.totalorder %s37, %s53
      %p55 = scmp.eq.s32.totalorder %s15, 0
      %p56 = por %p54, %p55
      %s57 = ssub.s32 %s16, %s28
      %s58 = ssub.s32 %s17, %s24
      %s59 = sor.u32 %s57, %s58
      %p60 = scmp.eq.s32.totalorder %s59, 0
      %s62 = sadd.s32 %s61, 1
      %s63 = scalar_select %p60, %s61, %s62
      %p66 = pneg %p60
      %p67 = scmp.eq.s32.totalorder %s9, 1
      %p68 = por %p66, %p67
      %p69 = scmp.ne.s32.totalorder %s61, %s64
      %p70 = scmp.eq.s32.totalorder %s9, 0
      %p71 = por %p69, %p70
      %p72 = scmp.ne.s32.totalorder %s61, %s64
      %p73 = scmp.eq.s32.totalorder %s14, 1
      %p74 = por %p72, %p73
      %p75 = scmp.ne.s32.totalorder %s64, %s65
      %p76 = scmp.eq.s32.totalorder %s14, 0
      %p77 = por %p75, %p76
      %p78 = scmp.ne.s32.totalorder %s64, %s65
      %p79 = scmp.eq.s32.totalorder %s15, 1
      %p80 = por %p78, %p79
      %p82 = scmp.ne.s32.totalorder %s65, %s81
      %p83 = scmp.eq.s32.totalorder %s15, 0
      %p84 = por %p82, %p83
      %s86 = sadd.s32 %s85, 1
      %p89 = scmp.eq.s32.totalorder %s9, 1
      %p90 = scmp.ne.s32.totalorder %s85, %s87
      %p91 = scmp.eq.s32.totalorder %s9, 0
      %p92 = por %p90, %p91
      %p93 = scmp.ne.s32.totalorder %s85, %s87
      %p94 = scmp.eq.s32.totalorder %s14, 1
      %p95 = por %p93, %p94
      %p96 = scmp.ne.s32.totalorder %s87, %s88
      %p97 = scmp.eq.s32.totalorder %s14, 0
      %p98 = por %p96, %p97
      %p99 = scmp.ne.s32.totalorder %s87, %s88
      %p100 = scmp.eq.s32.totalorder %s15, 1
      %p101 = por %p99, %p100
      %p103 = scmp.ne.s32.totalorder %s88, %s102
      %p104 = scmp.eq.s32.totalorder %s15, 0
      %p105 = por %p103, %p104
      %p106 = scmp.le.s32.totalorder 1, %s9
      %p107 = scmp.lt.s32.totalorder %s9, 3
      %p108 = pnand %p106, %p107
      %p109 = pneg %p108
      // Predicated region
      $region9: #{tpu_custom_call.1} parent=5 // pred_check
        _
      $region10: #{tpu_custom_call.1} parent=5 // pred_check_branch
        %111 = sbr.rel (%p108) target = $region12
      $region11: #{tpu_custom_call.1} parent=5 // pred_region
        %s112 = ssub.s32 %s9, 1
      $region12: #{tpu_custom_call.1} parent=5 // pred_fallthru
        _
      %p113 = scmp.lt.s32.totalorder %s9, 2
      // Predicated region
      $region13: #{tpu_custom_call.1} parent=5 // pred_check
        %p114 = pneg %p113
      $region14: #{tpu_custom_call.1} parent=5 // pred_check_branch
        %116 = sbr.rel (%p114) target = $region16
      $region15: #{tpu_custom_call.1} parent=5 // pred_region
        // Predicated region
        $region17: #{tpu_custom_call.1} parent=15 // pred_check
          %p117 = pneg %p43
        $region18: #{tpu_custom_call.1} parent=15 // pred_check_branch
          %119 = sbr.rel (%p117) target = $region20
        $region19: #{tpu_custom_call.1} parent=15 // pred_region
          %s120 = smul.u32 2, %s17
          %p121 = scmp.lt.s32.totalorder %s16, 1
          %s122 = scalar_select %p121, %s16, 1
          %p123 = scmp.lt.s32.totalorder %s120, 1
          %s124 = scalar_select %p123, %s120, 1
          %s125 = smul.addr %s122, 2
          %s126 = sadd.s32 %s124, %s125
          %s127 = smul.addr %s126, 8
          %s128 = scalar_lea.vmem %s0, %s127
          %s129 = smul.u32 2, %s17
        $region20: #{tpu_custom_call.1} parent=15 // pred_fallthru
          _
        // Predicated region
        $region21: #{tpu_custom_call.1} parent=15 // pred_check
          %p130 = pneg %p71
        $region22: #{tpu_custom_call.1} parent=15 // pred_check_branch
          %132 = sbr.rel (%p130) target = $region24
        $region23: #{tpu_custom_call.1} parent=15 // pred_region
          %s133 = smul.u32 2, %s17
          %p134 = scmp.lt.s32.totalorder %s16, 1
          %s135 = scalar_select %p134, %s16, 1
          %p136 = scmp.lt.s32.totalorder %s133, 1
          %s137 = scalar_select %p136, %s133, 1
          %s138 = smul.addr %s135, 2
          %s139 = sadd.s32 %s137, %s138
          %s140 = scalar_lea.vmem %s1, %s139
          %s141 = smul.u32 2, %s17
        $region24: #{tpu_custom_call.1} parent=15 // pred_fallthru
          _
      $region16: #{tpu_custom_call.1} parent=5 // pred_fallthru
        _
      %p142 = scmp.le.s32.totalorder 1, %s9
      %p143 = scmp.lt.s32.totalorder %s9, 3
      %p144 = pnand %p142, %p143
      %p145 = pneg %p144
      // Predicated region
      $region25: #{tpu_custom_call.1} parent=5 // pred_check
        _
      $region26: #{tpu_custom_call.1} parent=5 // pred_check_branch
        %147 = sbr.rel (%p144) target = $region28
      $region27: #{tpu_custom_call.1} parent=5 // pred_region
        %s148 = ssub.s32 %s9, 1
        %s149 = smul.u32 2, %s19
        %p150 = scmp.lt.s32.totalorder %s18, 1
        %s151 = scalar_select %p150, %s18, 1
        %p152 = scmp.lt.s32.totalorder %s149, 1
        %s153 = scalar_select %p152, %s149, 1
        %s154 = smul.addr %s151, 2
        %s155 = sadd.s32 %s153, %s154
        %s156 = smul.addr %s155, 8
        %s157 = scalar_lea.vmem %s0, %s156
        %p158 = pneg %p49
        %p159 = pneg %p46
        %s160 = smul.u32 2, %s19
        %p161 = scmp.lt.s32.totalorder %s18, 1
        %s162 = scalar_select %p161, %s18, 1
        %p163 = scmp.lt.s32.totalorder %s160, 1
        %s164 = scalar_select %p163, %s160, 1
        %s165 = smul.addr %s162, 2
        %s166 = sadd.s32 %s164, %s165
        %s167 = scalar_lea.vmem %s1, %s166
        %p168 = pneg %p77
        %p169 = pneg %p74
        %p170 = pneg %p98
        %p171 = pneg %p95
        %s172 = smul.u32 2, %s19
        %p173 = scmp.lt.s32.totalorder %s18, 1
        %s174 = scalar_select %p173, %s18, 1
        %p175 = scmp.lt.s32.totalorder %s172, 1
        %s176 = scalar_select %p175, %s172, 1
        %s177 = smul.addr %s174, 2
        %s178 = sadd.s32 %s176, %s177
        %s179 = smul.addr %s178, 8
        %s180 = scalar_lea.vmem %s0, %s179
        %s181 = smul.u32 2, %s19
        %s182 = smul.u32 2, %s19
        %p183 = scmp.lt.s32.totalorder %s18, 1
        %s184 = scalar_select %p183, %s18, 1
        %p185 = scmp.lt.s32.totalorder %s182, 1
        %s186 = scalar_select %p185, %s182, 1
        %s187 = smul.addr %s184, 2
        %s188 = sadd.s32 %s186, %s187
        %s189 = scalar_lea.vmem %s1, %s188
        %s190 = smul.u32 2, %s19
        %p191 = scmp.eq.s32.totalorder %s18, 0
        %p192 = scmp.eq.s32.totalorder %s19, 0
        %p193 = pnand %p191, %p192
        %p194 = pneg %p193
        // Predicated region
        $region29: #{tpu_custom_call.1} parent=27 // pred_check
          _
        $region30: #{tpu_custom_call.1} parent=27 // pred_check_branch
          %196 = sbr.rel (%p193) target = $region32
        $region31: #{tpu_custom_call.1} parent=27 // pred_region
          %v197 = vlaneseq
          %vm198 = vcmp.ge.s32.totalorder %v197, 0
          %vm199 = vcmp.lt.s32.totalorder %v197, 256
          %vm200 = vmand %vm198, %vm199
          %201 = vst.msk [vmem:[#allocation2] sm:$0x3] %vm200, 0.0
        $region32: #{tpu_custom_call.1} parent=27 // pred_fallthru
          _
        %v202 = vld [vmem:[%s180] sm:$0x7f]
        %v203 = vld [vmem:[%s180 + $0x8] sm:$0x7f]
        %v204 = vld [vmem:[%s189] sm:$0x3]
        %v205 = vlaneseq
        %v206 = vshrl.u32 %v205, 7
        %v207 = vlaneseq
        %v208 = vshrl.u32 %v207, 7
        %v209 = vsub.s32 0, %v208
        %v210 = vrot.slane %v204, %v209
        %v211 = vlaneseq
        %v212 = vshrl.u32 %v211, 7
        %v213 = vsub.s32 1, %v212
        %v214 = vrot.slane %v204, %v213
        %vm215 = vcmp.eq.s32.totalorder %v206, %v210
        %vm216 = vcmp.eq.s32.totalorder %v206, %v214
        %v217 = vsel %vm215, %v202, 0.0
        %v218 = vsel %vm216, %v203, 0.0
        %vm219 = vcmask 1046528
        %v220 = vsel %vm219, %v217, 0.0
        %v221 = vrot.slane %v220, 4
        %v222 = vadd.f32 %v220, %v221
        %v223 = vrot.slane %v222, 2
        %v224 = vadd.f32 %v222, %v223
        %v225 = vrot.slane %v224, 1
        %v226 = vadd.f32 %v224, %v225
        %v227 = vsel %vm219, %v218, 0.0
        %v228 = vrot.slane %v227, 4
        %v229 = vadd.f32 %v227, %v228
        %v230 = vrot.slane %v229, 2
        %v231 = vadd.f32 %v229, %v230
        %v232 = vrot.slane %v231, 1
        %v233 = vadd.f32 %v231, %v232
        %v234 = vsel %vm219, %v202, -inf
        %v235 = vrot.slane %v234, 4
        %v236 = vmax.f32 %v234, %v235
        %v237 = vrot.slane %v236, 2
        %v238 = vmax.f32 %v236, %v237
        %v239 = vrot.slane %v238, 1
        %v240 = vmax.f32 %v238, %v239
        %v241 = vsel %vm219, %v203, -inf
        %v242 = vrot.slane %v241, 4
        %v243 = vmax.f32 %v241, %v242
        %v244 = vrot.slane %v243, 2
        %v245 = vmax.f32 %v243, %v244
        %v246 = vrot.slane %v245, 1
        %v247 = vmax.f32 %v245, %v246
        %v248 = vsub.f32 %v202, %v240
        %v249 = vsub.f32 %v203, %v247
        %v250 = vmul.f32 %v248, 1.442695
        %v251 = vpow.pop %v250
        %v252 = vmul.f32 %v249, 1.442695
        %v253 = vpow.pop %v252
        %v254 = vsel %vm219, %v251, 0.0
        %v255 = vrot.slane %v254, 4
        %v256 = vadd.f32 %v254, %v255
        %v257 = vrot.slane %v256, 2
        %v258 = vadd.f32 %v256, %v257
        %v259 = vrot.slane %v258, 1
        %v260 = vadd.f32 %v258, %v259
        %v261 = vsel %vm219, %v253, 0.0
        %v262 = vrot.slane %v261, 4
        %v263 = vadd.f32 %v261, %v262
        %v264 = vrot.slane %v263, 2
        %v265 = vadd.f32 %v263, %v264
        %v266 = vrot.slane %v265, 1
        %v267 = vadd.f32 %v265, %v266
        %v268 = vlog2.pop %v260
        %v269 = vmul.f32 %v268, 0.6931472
        %v270 = vlog2.pop %v267
        %v271 = vmul.f32 %v270, 0.6931472
        %v272 = vadd.f32 %v240, %v269
        %v273 = vadd.f32 %v247, %v271
        %v274 = vsub.f32 %v226, %v272
        %v275 = vsub.f32 %v233, %v273
        %v276 = vmax.f32 %v274, -16.118095
        %v277 = vmax.f32 %v275, -16.118095
        %v278 = vmin.f32 %v276, -1.0000001e-07
        %v279 = vmin.f32 %v277, -1.0000001e-07
        %v280 = vsub.f32 0.0, %v278
        %v281 = vsub.f32 0.0, %v279
        %v282 = vlaneseq
        %v283 = vand.u32 %v282, 127
        %v284 = vadd.s32 %v283, 128
        %s285 = smul.u32 %s19, 256
        %v286 = vstv %s285
        %v287 = vadd.s32 %v286, %v283
        %v288 = vadd.s32 %v286, %v284
        %vm289 = vcmp.lt.s32.totalorder %v287, 256
        %vm290 = vcmp.lt.s32.totalorder %v288, 256
        %v291 = vsel %vm289, 1, 0
        %v292 = vsel %vm290, 1, 0
        %v293 = vcvt.s32.f32 %v291
        %v294 = vcvt.s32.f32 %v292
        %v295 = vld [vmem:[#allocation2] sm:$0x3]
        %v296 = vmul.f32 %v280, %v293
        %v297 = vmul.f32 %v281, %v294
        %v300 = vcombine.low %v296, %v297
        %v302 = vunpack.c.l.s4 1966171168
        %v303 = vunpack.c.0.s8 %v302
        %v304 = vlaneseq
        %v305 = vshrl.u32 %v304, 7
        %v306 = vsub.s32 %v303, %v305
        %v307 = vrot.slane %v300, %v306
        %v309 = vunpack.c.l.s4 1966171168
        %v310 = vunpack.c.0.s8 %v309
        %v311 = vlaneseq
        %v312 = vshrl.u32 %v311, 7
        %v313 = vsub.s32 %v310, %v312
        %v314 = vrot.slane %v307, %v313
        %v316 = vadd.f32 %v295, %v314
        %v317 = vlaneseq
        %vm318 = vcmp.ge.s32.totalorder %v317, 0
        %vm319 = vcmp.lt.s32.totalorder %v317, 256
        %vm320 = vmand %vm318, %vm319
        %321 = vst.msk [vmem:[#allocation2] sm:$0x3] %vm320, %v316
        %p322 = scmp.eq.s32.totalorder %s18, 1
        %p323 = pnand %p322, %p192
        %p324 = pneg %p323
        // Predicated region
        $region33: #{tpu_custom_call.1} parent=27 // pred_check
          _
        $region34: #{tpu_custom_call.1} parent=27 // pred_check_branch
          %326 = sbr.rel (%p323) target = $region36
        $region35: #{tpu_custom_call.1} parent=27 // pred_region
          %v327 = vld [vmem:[#allocation2] sm:$0x3]
          %v329 = vlaneseq
          %v330 = vshrl.u32 %v329, 7
          %v331 = vsub.s32 0, %v330
          %v332 = vrot.slane %v327, %v331
          %v333 = vlaneseq
          %v334 = vshrl.u32 %v333, 7
          %v335 = vsub.s32 1, %v334
          %v336 = vrot.slane %v327, %v335
          %vm339 = vcmask 1040384
          %v340 = vsel %vm339, %v332, 0.0
          %v341 = vsel %vm339, %v336, 0.0
          %v342 = vadd.f32 %v340, %v341
          %343 = vadd.xlane.f32.xlu0 %v342
          %v344 = vpop.xlane.xlu0 %343
          %v345 = vrot.slane %v344, 4
          %v346 = vadd.f32 %v344, %v345
          %v347 = vrot.slane %v346, 2
          %v348 = vadd.f32 %v346, %v347
          %v349 = vrot.slane %v348, 1
          %v350 = vadd.f32 %v348, %v349
          %s351 = vtos %v350
          %v352 = vstv %s351
          %v353 = vrcp.pop 512.0
          %v354 = vmul.f32 %v352, %v353
          %vm355 = vcmask 0
          %356 = vst.msk [vmem:[#allocation3] sm:$0x1] %vm355, %v354
        $region36: #{tpu_custom_call.1} parent=27 // pred_fallthru
          _
        // Predicated region
        $region37: #{tpu_custom_call.1} parent=27 // pred_check
          %p357 = pneg %p95
        $region38: #{tpu_custom_call.1} parent=27 // pred_check_branch
          %359 = sbr.rel (%p357) target = $region40
        $region39: #{tpu_custom_call.1} parent=27 // pred_region
          %s361 = ssub.s32 16, 16
          %362 = vsyncadd [#allocation4], %s361
          %s364 = sshll.u32 [#allocation3], 4
          %s365 = int_to_ptr.vmem [resolvable:$true] %s364
          %367 = dma.vmem_to_hbm [thread:$0]  %s365, 16, %s2, [#allocation4]
        $region40: #{tpu_custom_call.1} parent=27 // pred_fallthru
          _
        // Predicated region
        $region41: #{tpu_custom_call.1} parent=27 // pred_check
          %p368 = pneg %p95
        $region42: #{tpu_custom_call.1} parent=27 // pred_check_branch
          %370 = sbr.rel (%p368) target = $region44
        $region43: #{tpu_custom_call.1} parent=27 // pred_region
          %371 = dma.done [#allocation4], 16
        $region44: #{tpu_custom_call.1} parent=27 // pred_fallthru
          _
      $region28: #{tpu_custom_call.1} parent=5 // pred_fallthru
        _
      %p372 = scmp.le.s32.totalorder 2, %s9
      // Predicated region
      $region45: #{tpu_custom_call.1} parent=5 // pred_check
        %p373 = pneg %p372
      $region46: #{tpu_custom_call.1} parent=5 // pred_check_branch
        %375 = sbr.rel (%p373) target = $region48
      $region47: #{tpu_custom_call.1} parent=5 // pred_region
        %s376 = ssub.s32 %s9, 2
      $region48: #{tpu_custom_call.1} parent=5 // pred_fallthru
        _
    $region6: #{tpu_custom_call.1} parent=1 // loop_footer
      %s13 = sadd.s32 1, %s9
    $region7: #{tpu_custom_call.1} parent=1 // loop_footer_branch
      %8 = sbr.rel target = $region3
    $region8: #{tpu_custom_call.1} parent=1 // loop_exit
      _
    %377 = vsyncpa [#allocation4], 1
    %s378 = scalar_lea.sflag [#allocation4], 1
    %379 = vsyncpa %s378, 1

</llo_original>
